<compile_context>
chip_gen: v7x
topology: tpu7x:2x2x1
jax: 0.10.0
libtpu: 0.0.40
codegen_flags: <defaults>
</compile_context>

<pallas_src>
import functools

import jax
import jax.numpy as jnp
from jax import lax
from jax.experimental import pallas as pl
from jax.experimental.pallas import tpu as pltpu

_EPS = 1e-5                      # PyTorch BatchNorm2d default
_MIB = 1024 * 1024


# --------------------------------------------------------------------------
# Generation-aware sizing
# --------------------------------------------------------------------------
def _tpu_vmem_capacity_bytes():
    try:
        info = pltpu.get_tpu_info()
        cap = getattr(info, "vmem_capacity_bytes", None)
        if cap:
            return int(cap)
    except Exception:
        pass
    return 64 * _MIB             # conservative fallback: v7x per-TC VMEM


def _budgets():
    """Returns (apply_block_bytes, vmem_budget_bytes), generation-aware."""
    phys = _tpu_vmem_capacity_bytes()
    # Scoped-VMEM budget we are willing to request (leave compiler headroom).
    vmem_budget = int(min(max(phys - 16 * _MIB, 24 * _MIB), 80 * _MIB))
    if phys >= 100 * _MIB:       # v5e / v6e: 128 MiB physical VMEM
        apply_block_bytes = 8 * _MIB
    else:                         # v7x: 64 MiB physical, 3.2 TB/s HBM
        apply_block_bytes = 4 * _MIB
    return apply_block_bytes, vmem_budget


def _sublane_base(dtype):
    # 8 for f32, 16 for bf16, 32 for int8/fp8 (match the packed native tile).
    return max(8, 32 // jnp.dtype(dtype).itemsize)


def _round_up(x, m):
    return ((x + m - 1) // m) * m


# --------------------------------------------------------------------------
# Tile pickers
# --------------------------------------------------------------------------
def _pick_fused_tile_c(n, c, hw, dtype, vmem_budget):
    """Largest channel block s.t. the whole (N, tile_c, HW) slab (plus i/o
    double-buffers and f32 temporaries) fits the VMEM budget; prefers >= 2
    channel blocks so the grid axis can be megacore-split on v7x."""
    base_c = _sublane_base(dtype)
    padded_hw = _round_up(hw, 128)
    cands = [d for d in range(base_c, c + 1, base_c) if c % d == 0]
    if c not in cands:
        cands.append(c)
    cands = sorted(set(cands), reverse=True)
    split = [d for d in cands if c // d >= 2]
    ordered = (split + [d for d in cands if d not in split]) if split else cands
    for tc in ordered:
        slab_f32 = n * _round_up(tc, 8) * padded_hw * 4
        if 6 * slab_f32 <= vmem_budget:   # 2x in-buf + 2x out-buf + f32 temps
            return tc
    return None


def _pick_gap_tile_c(n, c, vmem_budget):
    """Channel block for the lane-dense (N, C) post-GAP layout (HW == 1)."""
    cands = [d for d in range(128, c + 1, 128) if c % d == 0]
    if c not in cands:
        cands.append(c)
    cands = sorted(set(cands), reverse=True)
    split = [d for d in cands if c // d >= 2]
    ordered = (split + [d for d in cands if d not in split]) if split else cands
    padded_n = _round_up(n, 8)
    for tc in ordered:
        if 6 * padded_n * _round_up(tc, 128) * 4 <= vmem_budget:
            return tc
    return None


def _pick_stream_tiles(n, c, hw, dtype, budget_bytes, want_c_split):
    """(tile_n, tile_c, tile_hw) exactly dividing (N, C, HW), obeying the
    (sublane, 128) block rule (or full dim), sized to ~budget_bytes of input."""
    item = jnp.dtype(dtype).itemsize
    base_c = _sublane_base(dtype)
    budget = max(budget_bytes // item, 1)           # elements

    # lane (innermost, HBM-contiguous) axis: longest multiple of 128 dividing
    # hw (fills the budget along the contiguous axis first), else full dim.
    if hw % 128 == 0:
        tile_hw = 128
        d = 128
        while d <= min(hw, budget):
            if hw % d == 0:
                tile_hw = d
            d += 128
    else:
        # TODO(synk): HW not a multiple of 128 forces a full-width lane block;
        # a padded / Element-based split would bound VMEM for pathological HW.
        tile_hw = hw
    padded_hw = _round_up(tile_hw, 128)

    # sublane axis: multiple of the dtype-aware base dividing C (or full C);
    # optionally keep >= 2 channel blocks (only "parallel" axis of the stats
    # pass -> megacore split on v7x).
    cands = [d for d in range(base_c, c + 1, base_c) if c % d == 0]
    if want_c_split:
        split = [d for d in cands if c // d >= 2]
        if split:
            cands = split
    if cands:
        c_cap = max(base_c, budget // padded_hw)
        fitting = [d for d in cands if d <= c_cap]
        tile_c = max(fitting) if fitting else min(cands)
    else:
        tile_c = c                                    # full dim is always legal
    padded_c = _round_up(tile_c, base_c)

    # outer axis: any divisor of N within the remaining budget.
    n_cap = max(1, budget // (padded_hw * padded_c))
    tile_n = 1
    for d in range(1, min(n, n_cap) + 1):
        if n % d == 0:
            tile_n = d
    return tile_n, tile_c, tile_hw


# --------------------------------------------------------------------------
# Kernels
# --------------------------------------------------------------------------
def _bn_fused_nchw_kernel(x_ref, gamma_ref, beta_ref, o_ref, *, eps, inv_count):
    """Single-read fused BN over one channel slab: (N, tile_c, HW) in VMEM."""
    x = x_ref[...].astype(jnp.float32)                          # (N, tc, HW)
    mean = jnp.sum(jnp.sum(x, axis=0), axis=-1, keepdims=True) * inv_count
    centered = x - mean
    var = jnp.sum(jnp.sum(centered * centered, axis=0),
                  axis=-1, keepdims=True) * inv_count           # (tc, 1)
    scale = gamma_ref[...] * lax.rsqrt(var + eps)               # EUP rsqrt
    o_ref[...] = (centered * scale + beta_ref[...]).astype(o_ref.dtype)


def _bn_fused_gap_kernel(x_ref, gamma_ref, beta_ref, o_ref, *, eps, inv_count):
    """Lane-dense fused BN for the post-GAP case: x is (N, tile_c), C on lanes."""
    x = x_ref[...].astype(jnp.float32)                          # (N, tc)
    mean = jnp.sum(x, axis=0, keepdims=True) * inv_count        # (1, tc)
    centered = x - mean
    var = jnp.sum(centered * centered, axis=0, keepdims=True) * inv_count
    scale = gamma_ref[...] * lax.rsqrt(var + eps)               # (1, tc)
    o_ref[...] = (centered * scale + beta_ref[...]).astype(o_ref.dtype)


def _bn_stats_kernel(x_ref, mean_ref, m2_ref):
    """Streamed pass 1: per-channel (mean, M2) via Chan's parallel combine.

    x_ref: (tile_n, tile_c, tile_hw); mean/m2: (tile_c, 1) resident accumulators.
    """
    tn, _, thw = x_ref.shape
    cnt = float(tn * thw)                 # elements/channel from this block

    # linear step over the (n, hw) reduction axes (last in the grid)
    k = pl.program_id(1) * pl.num_programs(2) + pl.program_id(2)

    @pl.when(k == 0)
    def _init():
        mean_ref[...] = jnp.zeros_like(mean_ref)
        m2_ref[...] = jnp.zeros_like(m2_ref)

    x = x_ref[...].astype(jnp.float32)
    tile_mean = jnp.sum(jnp.sum(x, axis=0), axis=-1, keepdims=True) * (1.0 / cnt)
    centered = x - tile_mean
    tile_m2 = jnp.sum(jnp.sum(centered * centered, axis=0),
                      axis=-1, keepdims=True)

    # Chan's combine.  Every tile contributes exactly `cnt` elements, so
    # w_mean = 1/(k+1) exactly (no f32 rounding of large counts),
    # w_m2 = n_a*n_b/(n_a+n_b) = cnt*k/(k+1).
    k_f = k.astype(jnp.float32)
    w_mean = 1.0 / (k_f + 1.0)
    w_m2 = cnt * k_f * w_mean

    mean_acc = mean_ref[...]
    delta = tile_mean - mean_acc
    mean_ref[...] = mean_acc + delta * w_mean
    m2_ref[...] = m2_ref[...] + tile_m2 + (delta * delta) * w_m2


def _bn_apply_kernel(x_ref, scale_ref, shift_ref, o_ref):
    """Streamed pass 2: y = x * scale + shift (affine folded per channel)."""
    x = x_ref[...].astype(jnp.float32)                 # (tn, tc, thw)
    o_ref[...] = (x * scale_ref[...] + shift_ref[...]).astype(o_ref.dtype)


# --------------------------------------------------------------------------
# Forward
# --------------------------------------------------------------------------
def bnneck_forward(x_nchw, gamma, beta, *, eps=_EPS, block_bytes=None,
                   force_two_pass=False):
    """BNNeck forward: training-mode BatchNorm2d over NCHW input."""
    n, c, h, w = x_nchw.shape
    hw = h * w
    out_dtype = x_nchw.dtype

    apply_block_bytes, vmem_budget = _budgets()
    if block_bytes is not None:
        apply_block_bytes = int(block_bytes)
    stats_block_bytes = 2 * apply_block_bytes   # stats pass only needs 2x block

    gamma_f = gamma.astype(jnp.float32)
    beta_f = beta.astype(jnp.float32)

    # ---- Path A: canonical post-GAP input (H = W = 1) -> lane-dense (N, C) --
    if hw == 1 and not force_two_pass:
        tile_c = _pick_gap_tile_c(n, c, vmem_budget)
        if tile_c is not None:
            x2 = x_nchw.reshape(n, c)                       # free reshape
            x_spec = pl.BlockSpec((n, tile_c), lambda ci: (0, ci))
            v_spec = pl.BlockSpec((1, tile_c), lambda ci: (0, ci))
            kern = functools.partial(_bn_fused_gap_kernel, eps=eps,
                                     inv_count=1.0 / float(n))
            out2 = pl.pallas_call(
                kern,
                out_shape=jax.ShapeDtypeStruct((n, c), out_dtype),
                grid=(c // tile_c,),
                in_specs=[x_spec, v_spec, v_spec],
                out_specs=x_spec,
                compiler_params=pltpu.CompilerParams(
                    dimension_semantics=("parallel",),
                    vmem_limit_bytes=vmem_budget),
            )(x2, gamma_f.reshape(1, c), beta_f.reshape(1, c))
            return out2.reshape(n, c, h, w)

    # ---- Path B: fused single-read when a whole channel slab fits VMEM -----
    if not force_two_pass:
        tile_c = _pick_fused_tile_c(n, c, hw, x_nchw.dtype, vmem_budget)
        if tile_c is not None:
            x3 = x_nchw.reshape(n, c, hw)                   # free reshape
            x_spec = pl.BlockSpec((n, tile_c, hw), lambda ci: (0, ci, 0))
            v_spec = pl.BlockSpec((tile_c, 1), lambda ci: (ci, 0))
            kern = functools.partial(_bn_fused_nchw_kernel, eps=eps,
                                     inv_count=1.0 / float(n * hw))
            out3 = pl.pallas_call(
                kern,
                out_shape=jax.ShapeDtypeStruct((n, c, hw), out_dtype),
                grid=(c // tile_c,),
                in_specs=[x_spec, v_spec, v_spec],
                out_specs=x_spec,
                compiler_params=pltpu.CompilerParams(
                    dimension_semantics=("parallel",),
                    vmem_limit_bytes=vmem_budget),
            )(x3, gamma_f.reshape(c, 1), beta_f.reshape(c, 1))
            return out3.reshape(n, c, h, w)

    # ---- Path C: streamed two-pass fallback (slab does not fit VMEM) -------
    x3 = x_nchw.reshape(n, c, hw)

    # pass 1: per-channel mean / M2 (its own, larger block; >= 2 channel blocks
    # preferred so the only "parallel" axis can megacore-split on v7x).
    s_tn, s_tc, s_thw = _pick_stream_tiles(n, c, hw, x_nchw.dtype,
                                           stats_block_bytes, want_c_split=True)
    s_x_spec = pl.BlockSpec((s_tn, s_tc, s_thw), lambda ci, ni, hi: (ni, ci, hi))
    s_v_spec = pl.BlockSpec((s_tc, 1), lambda ci, ni, hi: (ci, 0))

    mean, m2 = pl.pallas_call(
        _bn_stats_kernel,
        out_shape=(jax.ShapeDtypeStruct((c, 1), jnp.float32),
                   jax.ShapeDtypeStruct((c, 1), jnp.float32)),
        grid=(c // s_tc, n // s_tn, hw // s_thw),
        in_specs=[s_x_spec],
        out_specs=(s_v_spec, s_v_spec),
        compiler_params=pltpu.CompilerParams(
            dimension_semantics=("parallel", "arbitrary", "arbitrary"),
            vmem_limit_bytes=vmem_budget),
    )(x3)

    # tiny per-channel finalize in plain JAX
    count = float(n * hw)
    mean_c = mean.reshape(c)
    var_c = jnp.maximum(m2.reshape(c) / count, 0.0)     # biased variance
    inv_std = lax.rsqrt(var_c + eps)
    scale = gamma_f * inv_std
    shift = beta_f - mean_c * scale

    # pass 2: y = x * scale + shift (all axes parallel)
    a_tn, a_tc, a_thw = _pick_stream_tiles(n, c, hw, x_nchw.dtype,
                                           apply_block_bytes, want_c_split=False)
    a_x_spec = pl.BlockSpec((a_tn, a_tc, a_thw), lambda ci, ni, hi: (ni, ci, hi))
    a_v_spec = pl.BlockSpec((a_tc, 1), lambda ci, ni, hi: (ci, 0))

    out3 = pl.pallas_call(
        _bn_apply_kernel,
        out_shape=jax.ShapeDtypeStruct((n, c, hw), out_dtype),
        grid=(c // a_tc, n // a_tn, hw // a_thw),
        in_specs=[a_x_spec, a_v_spec, a_v_spec],
        out_specs=a_x_spec,
        compiler_params=pltpu.CompilerParams(
            dimension_semantics=("parallel", "parallel", "parallel"),
            vmem_limit_bytes=vmem_budget),
    )(x3, scale.reshape(c, 1), shift.reshape(c, 1))

    return out3.reshape(n, c, h, w)


# --------------------------------------------------------------------------
# Reference + tests
# --------------------------------------------------------------------------
def _reference(x, gamma, beta, eps=_EPS):
    mean = jnp.mean(x, axis=(0, 2, 3), keepdims=True)
    var = jnp.mean((x - mean) ** 2, axis=(0, 2, 3), keepdims=True)
    c = x.shape[1]
    return ((x - mean) / jnp.sqrt(var + eps) * gamma.reshape(1, c, 1, 1)
            + beta.reshape(1, c, 1, 1))


if __name__ == "__main__":
    key = jax.random.PRNGKey(0)

    # Test 1: small NCHW feature map -> fused single-read path.
    N, C, H, W = 2, 4, 16, 16
    x = jax.random.normal(key, (N, C, H, W), dtype=jnp.float32)
    gamma = jnp.ones((C,), dtype=jnp.float32)   # weights_init_kaiming: w=1, b=0
    beta = jnp.zeros((C,), dtype=jnp.float32)
    out = jax.block_until_ready(bnneck_forward(x, gamma, beta))
    ref = _reference(x, gamma, beta)
    assert out.shape == (N, C, H, W)
    assert jnp.max(jnp.abs(out - ref)) < 1e-4

    # Test 2: canonical post-GAP BNNeck input (H = W = 1) -> lane-dense path.
    k1, k2, k3 = jax.random.split(jax.random.PRNGKey(0), 3)
    N1, C1 = 8, 256
    x1 = jax.random.normal(k1, (N1, C1, 1, 1), dtype=jnp.float32) * 2.0 + 0.3
    g1 = 1.0 + 0.1 * jax.random.normal(k2, (C1,), dtype=jnp.float32)
    b1 = 0.1 * jax.random.normal(k3, (C1,), dtype=jnp.float32)
    out1 = jax.block_until_ready(bnneck_forward(x1, g1, b1))
    ref1 = _reference(x1, g1, b1)
    assert jnp.max(jnp.abs(out1 - ref1)) < 1e-4

    # Test 3: force the streamed two-pass fallback (Chan combine across tiles).
    key2 = jax.random.PRNGKey(1)
    N2, C2, H2, W2 = 4, 8, 64, 64
    x2 = jax.random.normal(key2, (N2, C2, H2, W2), dtype=jnp.float32) * 2.0 + 0.5
    g2 = jnp.ones((C2,), dtype=jnp.float32)
    b2 = jnp.zeros((C2,), dtype=jnp.float32)
    out2 = jax.block_until_ready(
        bnneck_forward(x2, g2, b2, block_bytes=128 * 1024, force_two_pass=True))
    ref2 = _reference(x2, g2, b2)
    assert jnp.max(jnp.abs(out2 - ref2)) < 1e-4

    print("KERNEL_OK")
</pallas_src>

<mosaic_0001>
module attributes {stable_mosaic.version = 11 : i64} {
  func.func @_bn_fused_nchw_kernel(%arg0: i32, %arg1: memref<2x4x256xf32, #tpu.memory_space<vmem>>, %arg2: memref<4x1xf32, #tpu.memory_space<vmem>>, %arg3: memref<4x1xf32, #tpu.memory_space<vmem>>, %arg4: memref<2x4x256xf32, #tpu.memory_space<vmem>>) attributes {dimension_semantics = [#tpu.dimension_semantics<parallel>], iteration_bounds = array<i64: 1>, scalar_prefetch = 0 : i64, scratch_operands = 0 : i64, tpu.core_type = #tpu.core_type<tc>, window_params = [{transform_indices = @transform_0, window_bounds = array<i64: 2, 4, 256>}, {transform_indices = @transform_1, window_bounds = array<i64: 4, 1>}, {transform_indices = @transform_2, window_bounds = array<i64: 4, 1>}, {transform_indices = @transform_3, window_bounds = array<i64: 2, 4, 256>}]} {
    %c0 = arith.constant 0 : index
    %c0_0 = arith.constant 0 : index
    %c0_1 = arith.constant 0 : index
    %0 = vector.load %arg1[%c0, %c0_0, %c0_1] : memref<2x4x256xf32, #tpu.memory_space<vmem>>, vector<2x4x256xf32>
    %cst = arith.constant dense<0.000000e+00> : vector<4x256xf32>
    %1 = vector.multi_reduction <add>, %0, %cst [0] : vector<2x4x256xf32> to vector<4x256xf32>
    %cst_2 = arith.constant dense<0.000000e+00> : vector<4xf32>
    %2 = vector.multi_reduction <add>, %1, %cst_2 [1] : vector<4x256xf32> to vector<4xf32>
    %3 = vector.shape_cast %2 : vector<4xf32> to vector<4x1xf32>
    %cst_3 = arith.constant 0.001953125 : f32
    %4 = vector.broadcast %cst_3 : f32 to vector<4x1xf32>
    %5 = arith.mulf %3, %4 : vector<4x1xf32>
    %6 = vector.shape_cast %5 : vector<4x1xf32> to vector<1x4x1xf32>
    %7 = vector.broadcast %6 : vector<1x4x1xf32> to vector<2x4x256xf32>
    %8 = arith.subf %0, %7 : vector<2x4x256xf32>
    %9 = arith.mulf %8, %8 : vector<2x4x256xf32>
    %cst_4 = arith.constant dense<0.000000e+00> : vector<4x256xf32>
    %10 = vector.multi_reduction <add>, %9, %cst_4 [0] : vector<2x4x256xf32> to vector<4x256xf32>
    %cst_5 = arith.constant dense<0.000000e+00> : vector<4xf32>
    %11 = vector.multi_reduction <add>, %10, %cst_5 [1] : vector<4x256xf32> to vector<4xf32>
    %12 = vector.shape_cast %11 : vector<4xf32> to vector<4x1xf32>
    %cst_6 = arith.constant 0.001953125 : f32
    %13 = vector.broadcast %cst_6 : f32 to vector<4x1xf32>
    %14 = arith.mulf %12, %13 : vector<4x1xf32>
    %c0_7 = arith.constant 0 : index
    %c0_8 = arith.constant 0 : index
    %15 = vector.load %arg2[%c0_7, %c0_8] : memref<4x1xf32, #tpu.memory_space<vmem>>, vector<4x1xf32>
    %cst_9 = arith.constant 9.99999974E-6 : f32
    %16 = vector.broadcast %cst_9 : f32 to vector<4x1xf32>
    %17 = arith.addf %14, %16 : vector<4x1xf32>
    %18 = math.rsqrt %17 : vector<4x1xf32>
    %19 = arith.mulf %15, %18 : vector<4x1xf32>
    %20 = vector.shape_cast %19 : vector<4x1xf32> to vector<1x4x1xf32>
    %21 = vector.broadcast %20 : vector<1x4x1xf32> to vector<2x4x256xf32>
    %22 = arith.mulf %8, %21 : vector<2x4x256xf32>
    %c0_10 = arith.constant 0 : index
    %c0_11 = arith.constant 0 : index
    %23 = vector.load %arg3[%c0_10, %c0_11] : memref<4x1xf32, #tpu.memory_space<vmem>>, vector<4x1xf32>
    %24 = vector.shape_cast %23 : vector<4x1xf32> to vector<1x4x1xf32>
    %25 = vector.broadcast %24 : vector<1x4x1xf32> to vector<2x4x256xf32>
    %26 = arith.addf %22, %25 : vector<2x4x256xf32>
    %c0_12 = arith.constant 0 : index
    %c0_13 = arith.constant 0 : index
    %c0_14 = arith.constant 0 : index
    %27 = vector.load %arg4[%c0_12, %c0_13, %c0_14] : memref<2x4x256xf32, #tpu.memory_space<vmem>>, vector<2x4x256xf32>
    tpu.vector_store %arg4[%c0_12, %c0_13, %c0_14], %26 {strides = array<i32>} : memref<2x4x256xf32, #tpu.memory_space<vmem>>, vector<2x4x256xf32>,
    return
  }
  func.func @transform_0(%arg0: i32) -> (i32, i32, i32) {
    %c0_i32 = arith.constant 0 : i32
    %c0_i32_0 = arith.constant 0 : i32
    %c0_i32_1 = arith.constant 0 : i32
    return %c0_i32, %arg0, %c0_i32_0 : i32, i32, i32
  }
  func.func @transform_1(%arg0: i32) -> (i32, i32) {
    %c0_i32 = arith.constant 0 : i32
    %c0_i32_0 = arith.constant 0 : i32
    return %arg0, %c0_i32 : i32, i32
  }
  func.func @transform_2(%arg0: i32) -> (i32, i32) {
    %c0_i32 = arith.constant 0 : i32
    %c0_i32_0 = arith.constant 0 : i32
    return %arg0, %c0_i32 : i32, i32
  }
  func.func @transform_3(%arg0: i32) -> (i32, i32, i32) {
    %c0_i32 = arith.constant 0 : i32
    %c0_i32_0 = arith.constant 0 : i32
    %c0_i32_1 = arith.constant 0 : i32
    return %c0_i32, %arg0, %c0_i32_0 : i32, i32, i32
  }
}

</mosaic_0001>

<llo_original>
// kernel: tpu_custom_call.1
$region0: #{tpu_custom_call.1}
  #allocation0 [shape = 'u32[]', space=smem, size = 0x4, offset = 0x4, fixed_abs, tag = 'smem constant byte address 0x4 - core index']
  #allocation1 [shape = 'u32[144,128]{1,0:T(1,128)}', space=vmem, size = 0x12000, scoped, tag = 'internal scratch']
  %s0 = inlined_call_operand.hbm [shape: f32[2,4,256], index: 0, kind: input, shape index: {}]
  %s1 = inlined_call_operand.vmem [shape: f32[4,1], index: 1, kind: input, shape index: {}]
  %s2 = inlined_call_operand.vmem [shape: f32[4,1], index: 2, kind: input, shape index: {}]
  %s3 = inlined_call_operand.hbm [shape: f32[2,4,256], index: 3, kind: output, shape index: {}]
  %s4 = sld [smem:[#allocation0]]
  $region26: #{tpu_custom_call.1} parent=0
    _
  %s6 = ssub.s32 1, %s4
  %s7 = scalar_select 0, %s6, %s4
  $region1: #{tpu_custom_call.1} parent=0
    #allocation2 [shape = 'u8[8192]{0}', space=vmem, size = 0x2000, scoped, tag = 'input window, operand 0, single buffered']
    #allocation3 [shape = 's32[1]{0}', space=sflag, size = 0x4, scoped, tag = 'scoped memory for tpu_custom_call.1']
    #allocation4 [shape = 's32[1]{0}', space=sflag, size = 0x4, scoped, tag = 'scoped memory for tpu_custom_call.1']
    #allocation5 [shape = 'u8[8192]{0}', space=vmem, size = 0x2000, scoped, tag = 'output window, operand 0, single buffered']
    %8 = vsyncpa [#allocation3], 0
    %9 = vsyncpa [#allocation4], 0
    // Predicated region
    $region2: #{tpu_custom_call.1} parent=1 // pred_check
      _
    $region3: #{tpu_custom_call.1} parent=1 // pred_check_branch
      %11 = sbr.rel (0) target = $region5
    $region4: #{tpu_custom_call.1} parent=1 // pred_region
      %s13 = ssub.s32 256, 256
      %14 = vsyncadd [#allocation3], %s13
      %s15 = sshll.u32 [#allocation2], 4
      %s16 = int_to_ptr.vmem [resolvable:$true] %s15
      %21 = dma.hbm_to_vmem [thread:$0]  %s0, 256, %s16, [#allocation3], 128, 128, 8
    $region5: #{tpu_custom_call.1} parent=1 // pred_fallthru
      _
    // Predicated region
    $region6: #{tpu_custom_call.1} parent=1 // pred_check
      _
    $region7: #{tpu_custom_call.1} parent=1 // pred_check_branch
      %23 = sbr.rel (0) target = $region9
    $region8: #{tpu_custom_call.1} parent=1 // pred_region
      _
    $region9: #{tpu_custom_call.1} parent=1 // pred_fallthru
      _
    // Predicated region
    $region10: #{tpu_custom_call.1} parent=1 // pred_check
      _
    $region11: #{tpu_custom_call.1} parent=1 // pred_check_branch
      %25 = sbr.rel (0) target = $region13
    $region12: #{tpu_custom_call.1} parent=1 // pred_region
      _
    $region13: #{tpu_custom_call.1} parent=1 // pred_fallthru
      _
    // Predicated region
    $region14: #{tpu_custom_call.1} parent=1 // pred_check
      _
    $region15: #{tpu_custom_call.1} parent=1 // pred_check_branch
      %27 = sbr.rel (0) target = $region17
    $region16: #{tpu_custom_call.1} parent=1 // pred_region
      %28 = dma.done [#allocation3], 256
    $region17: #{tpu_custom_call.1} parent=1 // pred_fallthru
      _
    %v29 = vld [vmem:[#allocation2] sm:$0xff]
    %v30 = vld [vmem:[#allocation2 + $0x8] sm:$0xff]
    %v33 = vcombine.high %v29, %v29
    %v34 = vcombine.high %v30, %v30
    %vm37 = vcmask 1043456
    %v38 = vsel %vm37, %v29, 0.0
    %v39 = vsel %vm37, %v30, 0.0
    %v40 = vadd.f32 %v38, %v39
    %v41 = vsel %vm37, %v33, 0.0
    %v42 = vsel %vm37, %v34, 0.0
    %v43 = vadd.f32 %v41, %v42
    %v44 = vsel %vm37, %v40, 0.0
    %v45 = vsel %vm37, %v43, 0.0
    %v46 = vadd.f32 %v44, %v45
    %47 = vadd.xlane.f32.xlu0 %v46
    %v48 = vpop.xlane.xlu0 %47
    %v49 = vmul.f32 %v48, 0.001953125
    %v52 = vunpack.c.l.s4 839922192
    %v53 = vunpack.c.0.s8 %v52
    %v54 = vlaneseq
    %v55 = vshrl.u32 %v54, 7
    %v56 = vsub.s32 %v53, %v55
    %v57 = vrot.slane %v49, %v56
    %v59 = vsub.f32 %v29, %v57
    %v60 = vsub.f32 %v30, %v57
    %v61 = vmul.f32 %v59, %v59
    %v62 = vmul.f32 %v60, %v60
    %v65 = vcombine.high %v61, %v61
    %v66 = vcombine.high %v62, %v62
    %v69 = vsel %vm37, %v61, 0.0
    %v70 = vsel %vm37, %v62, 0.0
    %v71 = vadd.f32 %v69, %v70
    %v72 = vsel %vm37, %v65, 0.0
    %v73 = vsel %vm37, %v66, 0.0
    %v74 = vadd.f32 %v72, %v73
    %v75 = vsel %vm37, %v71, 0.0
    %v76 = vsel %vm37, %v74, 0.0
    %v77 = vadd.f32 %v75, %v76
    %78 = vadd.xlane.f32.xlu0 %v77
    %v79 = vpop.xlane.xlu0 %78
    %v80 = vmul.f32 %v79, 0.001953125
    %v81 = vld [vmem:[%s1] sm:$0xf]
    %v82 = vadd.f32 %v80, 1e-05
    %v83 = vrsqrt.pop %v82
    %v84 = vmul.f32 %v81, %v83
    %86 = vset.pattern.permute.xlu0 0
    %87 = vperm.xlu0 %86, %v84
    %v88 = vpop.permute.xlu0 %87
    %v90 = vunpack.c.l.s4 839922192
    %v91 = vunpack.c.0.s8 %v90
    %v92 = vlaneseq
    %v93 = vshrl.u32 %v92, 7
    %v94 = vsub.s32 %v91, %v93
    %v95 = vrot.slane %v88, %v94
    %v97 = vmul.f32 %v59, %v95
    %v98 = vmul.f32 %v60, %v95
    %v99 = vld [vmem:[%s2] sm:$0xf]
    %101 = vset.pattern.permute.xlu0 0
    %102 = vperm.xlu0 %101, %v99
    %v103 = vpop.permute.xlu0 %102
    %v105 = vunpack.c.l.s4 839922192
    %v106 = vunpack.c.0.s8 %v105
    %v107 = vlaneseq
    %v108 = vshrl.u32 %v107, 7
    %v109 = vsub.s32 %v106, %v108
    %v110 = vrot.slane %v103, %v109
    %v112 = vadd.f32 %v97, %v110
    %v113 = vadd.f32 %v98, %v110
    %114 = vst [vmem:[#allocation5] sm:$0xff] %v112
    %115 = vst [vmem:[#allocation5 + $0x8] sm:$0xff] %v113
    // Predicated region
    $region18: #{tpu_custom_call.1} parent=1 // pred_check
      _
    $region19: #{tpu_custom_call.1} parent=1 // pred_check_branch
      %117 = sbr.rel (0) target = $region21
    $region20: #{tpu_custom_call.1} parent=1 // pred_region
      %s119 = ssub.s32 256, 256
      %120 = vsyncadd [#allocation4], %s119
      %s121 = sshll.u32 [#allocation5], 4
      %s122 = int_to_ptr.vmem [resolvable:$true] %s121
      %127 = dma.vmem_to_hbm [thread:$0]  %s122, 256, %s3, [#allocation4], 128, 128, 8
    $region21: #{tpu_custom_call.1} parent=1 // pred_fallthru
      _
    // Predicated region
    $region22: #{tpu_custom_call.1} parent=1 // pred_check
      _
    $region23: #{tpu_custom_call.1} parent=1 // pred_check_branch
      %129 = sbr.rel (0) target = $region25
    $region24: #{tpu_custom_call.1} parent=1 // pred_region
      %130 = dma.done [#allocation4], 256
    $region25: #{tpu_custom_call.1} parent=1 // pred_fallthru
      _
    %131 = vsyncpa [#allocation3], 1
    %132 = vsyncpa [#allocation4], 1

</llo_original>
